<compile_context>
chip_gen: v7x
topology: tpu7x:2x2x1
jax: 0.10.0
libtpu: 0.0.40
codegen_flags: <defaults>
</compile_context>

<pallas_src>
import functools

import jax
import jax.numpy as jnp
from jax.experimental import pallas as pl
from jax.experimental.pallas import tpu as pltpu


def _vmem_limit_bytes():
    """~75% of physical VMEM, capped at 96 MiB (=> ~48 MiB on v7x, 96 MiB on v5e/v6e)."""
    phys = 64 * 1024 * 1024
    try:
        cap = getattr(pltpu.get_tpu_info(), "vmem_capacity_bytes", None)
        if cap:
            phys = int(cap)
    except Exception:
        pass
    return int(min(phys * 3 // 4, 96 * 1024 * 1024))


_VMEM_LIMIT = _vmem_limit_bytes()


def _pick_tile(dim, cap, align):
    """Largest multiple-of-`align` exact divisor of `dim` that is <= cap (or `dim` itself).

    Always returns an exact divisor -> grids tile evenly, no pad/slice HBM copies. Returns
    either a multiple of `align` or the full dim (which satisfies the (8,128) block rule).
    """
    if dim <= cap or dim % align != 0:
        return dim
    t = (cap // align) * align
    while t >= align:
        if dim % t == 0:
            return t
        t -= align
    return dim


# ---------------------------------------------------------------------------
# exact-ish GELU (PyTorch F.gelu uses erf; use the Abramowitz & Stegun 7.1.26
# polynomial, |err| <= 1.5e-7 -- only exp/VPU ops, no erf lowering needed).
# ---------------------------------------------------------------------------
def _erf_approx(z):
    a1, a2, a3, a4, a5 = 0.254829592, -0.284496736, 1.421413741, -1.453152027, 1.061405429
    p = 0.3275911
    sign = jnp.where(z >= 0.0, 1.0, -1.0)
    za = jnp.abs(z)
    t = 1.0 / (1.0 + p * za)   # TODO(synk): pl.reciprocal(approx=True) moves this to the EUP slot
    poly = ((((a5 * t + a4) * t + a3) * t + a2) * t + a1) * t
    return sign * (1.0 - poly * jnp.exp(-za * za))


def _gelu(y):
    return 0.5 * y * (1.0 + _erf_approx(y * 0.7071067811865476))


# ---------------------------------------------------------------------------
# Standalone LayerNorm (only used on the post-LN path; pre-LN fuses LN into matmuls)
# ---------------------------------------------------------------------------
def _layernorm_kernel(x_ref, w_ref, b_ref, o_ref, *, eps):
    x = x_ref[...].astype(jnp.float32)
    mean = jnp.mean(x, axis=-1, keepdims=True)
    xc = x - mean
    var = jnp.mean(xc * xc, axis=-1, keepdims=True)      # biased variance == F.layer_norm
    y = xc * jax.lax.rsqrt(var + eps)
    y = y * w_ref[...].astype(jnp.float32) + b_ref[...].astype(jnp.float32)
    o_ref[...] = y.astype(o_ref.dtype)


def layer_norm(x2, weight, bias, eps=1e-5, block_rows_cap=1024):
    """x2: (R, H); weight/bias: (H,). Large row tiles (mem-bound kernel, ~85% roofline)."""
    R, H = x2.shape
    br = _pick_tile(R, block_rows_cap, 8)
    w2 = weight.reshape(1, H)
    b2 = bias.reshape(1, H)
    return pl.pallas_call(
        functools.partial(_layernorm_kernel, eps=eps),
        out_shape=jax.ShapeDtypeStruct((R, H), x2.dtype),
        grid_spec=pltpu.PrefetchScalarGridSpec(
            num_scalar_prefetch=0,
            grid=(R // br,),
            in_specs=[
                pl.BlockSpec((br, H), lambda i: (i, 0)),
                pl.BlockSpec((1, H), lambda i: (0, 0)),
                pl.BlockSpec((1, H), lambda i: (0, 0)),
            ],
            out_specs=pl.BlockSpec((br, H), lambda i: (i, 0)),
        ),
        compiler_params=pltpu.CompilerParams(
            dimension_semantics=("parallel",),
            vmem_limit_bytes=_VMEM_LIMIT),
    )(x2, w2, b2)


# ---------------------------------------------------------------------------
# Linear: y = act(LN?(x) @ W + b) [+ residual], tiled over (M, N, K)
#   - optional LayerNorm prologue (forces tk == K so the full row is resident)
#   - bias / gelu / residual fused into the last-K epilogue
# ---------------------------------------------------------------------------
def linear(x, w, b, *, activation=None, residual=None, ln=None,
           tm_cap=512, tn_cap=1024, tk_cap=1024):
    M, K = x.shape
    Kw, N = w.shape
    assert K == Kw
    has_ln = ln is not None
    has_res = residual is not None

    tm = _pick_tile(M, tm_cap, 8)
    tn = _pick_tile(N, tn_cap, 128)
    # LN prologue needs the whole row resident -> single K step.
    tk = K if has_ln else _pick_tile(K, tk_cap, 128)
    nk = K // tk
    grid = (M // tm, N // tn, nk)
    single_k = (nk == 1)

    b2 = b.reshape(1, N)
    if has_ln:
        ln_w, ln_b, ln_eps = ln
        lnw2 = ln_w.reshape(1, K)
        lnb2 = ln_b.reshape(1, K)

    def kernel(*refs):
        x_ref, w_ref, b_ref = refs[0], refs[1], refs[2]
        pos = 3
        lnw_ref = lnb_ref = r_ref = None
        if has_ln:
            lnw_ref, lnb_ref = refs[pos], refs[pos + 1]
            pos += 2
        if has_res:
            r_ref = refs[pos]
            pos += 1
        o_ref = refs[pos]
        acc_ref = None if single_k else refs[pos + 1]

        xv = x_ref[...]
        if has_ln:
            xf = xv.astype(jnp.float32)
            mean = jnp.mean(xf, axis=-1, keepdims=True)
            xc = xf - mean
            var = jnp.mean(xc * xc, axis=-1, keepdims=True)
            xn = xc * jax.lax.rsqrt(var + ln_eps)
            xn = xn * lnw_ref[...].astype(jnp.float32) + lnb_ref[...].astype(jnp.float32)
            xv = xn.astype(x_ref.dtype)       # bf16 input -> bf16 MXU operand
        partial = jnp.dot(xv, w_ref[...], preferred_element_type=jnp.float32)

        def epilogue(acc):
            y = acc + b_ref[...].astype(jnp.float32)
            if activation == "gelu":
                y = _gelu(y)
            if has_res:
                y = y + r_ref[...].astype(jnp.float32)
            o_ref[...] = y.astype(o_ref.dtype)

        if single_k:
            epilogue(partial)
        else:
            k_idx = pl.program_id(2)

            @pl.when(k_idx == 0)
            def _():
                acc_ref[...] = jnp.zeros_like(acc_ref)

            acc_ref[...] += partial

            @pl.when(k_idx == nk - 1)
            def _():
                epilogue(acc_ref[...])

    in_specs = [
        pl.BlockSpec((tm, tk), lambda i, j, k: (i, k)),
        pl.BlockSpec((tk, tn), lambda i, j, k: (k, j)),
        pl.BlockSpec((1, tn), lambda i, j, k: (0, j)),
    ]
    inputs = [x, w, b2]
    if has_ln:
        in_specs += [pl.BlockSpec((1, K), lambda i, j, k: (0, 0)),
                     pl.BlockSpec((1, K), lambda i, j, k: (0, 0))]
        inputs += [lnw2, lnb2]
    if has_res:
        in_specs.append(pl.BlockSpec((tm, tn), lambda i, j, k: (i, j)))
        inputs.append(residual)

    scratch = [] if single_k else [pltpu.VMEM((tm, tn), jnp.float32)]

    return pl.pallas_call(
        kernel,
        out_shape=jax.ShapeDtypeStruct((M, N), x.dtype),
        grid_spec=pltpu.PrefetchScalarGridSpec(
            num_scalar_prefetch=0,
            grid=grid,
            in_specs=in_specs,
            out_specs=pl.BlockSpec((tm, tn), lambda i, j, k: (i, j)),
            scratch_shapes=scratch,
        ),
        compiler_params=pltpu.CompilerParams(
            dimension_semantics=("parallel", "parallel", "arbitrary"),
            vmem_limit_bytes=_VMEM_LIMIT),
    )(*inputs)


# ---------------------------------------------------------------------------
# Flash-style attention reading q/k/v directly from the fused (B*S, 3H) QKV buffer.
# Grid: (batch, q_tiles, kv_tiles); online softmax stats per head in VMEM scratch.
# Heads are sliced out of the lane dim inside the kernel (static slices; the (tq, H)
# block stays lane-dense for loads and the (tq, H) ctx store is a single unmasked store).
# ---------------------------------------------------------------------------
def _flash_attn_kernel(*refs, num_heads, scaling, has_bias, kv_steps):
    if has_bias:
        q_ref, k_ref, v_ref, bias_ref, o_ref, m_sc, l_sc, acc_sc = refs
    else:
        q_ref, k_ref, v_ref, o_ref, m_sc, l_sc, acc_sc = refs
        bias_ref = None
    ki = pl.program_id(2)

    @pl.when(ki == 0)
    def _():
        m_sc[...] = jnp.full_like(m_sc, -jnp.inf)
        l_sc[...] = jnp.zeros_like(l_sc)
        acc_sc[...] = jnp.zeros_like(acc_sc)

    H = q_ref.shape[1]
    D = H // num_heads
    q = q_ref[...]
    k = k_ref[...]
    v = v_ref[...]

    for h in range(num_heads):
        lo = h * D
        qh = q[:, lo:lo + D]                    # (tq, D)  caller dtype (bf16 -> bf16 MXU)
        kh = k[:, lo:lo + D]                    # (tkv, D)
        vh = v[:, lo:lo + D]                    # (tkv, D)
        s = jax.lax.dot_general(qh, kh, (((1,), (1,)), ((), ())),
                                preferred_element_type=jnp.float32) * scaling
        if bias_ref is not None:
            s = s + bias_ref[h].astype(jnp.float32)
        m_prev = m_sc[h]                        # (tq, 1)
        m_new = jnp.maximum(m_prev, jnp.max(s, axis=-1, keepdims=True))
        alpha = jnp.exp(m_prev - m_new)
        p = jnp.exp(s - m_new)                  # unnormalized probs (deferred normalization)
        l_sc[h] = alpha * l_sc[h] + jnp.sum(p, axis=-1, keepdims=True)
        acc_sc[h] = alpha * acc_sc[h] + jnp.dot(p.astype(vh.dtype), vh,
                                                preferred_element_type=jnp.float32)
        m_sc[h] = m_new

    @pl.when(ki == kv_steps - 1)
    def _():
        heads_out = []
        for h in range(num_heads):
            # TODO(synk): pl.reciprocal(..., approx=True) would use the EUP slot
            # (~1e-4 rel err); exact divide kept for tight numerical parity.
            heads_out.append(acc_sc[h] * (1.0 / l_sc[h]))
        o_ref[...] = jnp.concatenate(heads_out, axis=-1).astype(o_ref.dtype)


def attention(qkv, *, B, S, H, num_heads, scaling, attn_bias=None,
              tq_cap=256, tkv_cap=512):
    """qkv: fused (B*S, 3H) projection; returns merged-head ctx as (B*S, H)."""
    BS, H3 = qkv.shape
    assert BS == B * S and H3 == 3 * H
    has_bias = attn_bias is not None
    D = H // num_heads

    tq = _pick_tile(S, tq_cap, 8)
    # bias tiles put tkv on the lane axis -> need a multiple of 128 (or full S).
    tkv = _pick_tile(S, tkv_cap, 128 if has_bias else 8)
    qpb = S // tq          # q blocks per batch
    kpb = S // tkv         # kv blocks per batch

    fused = (H % 128 == 0)
    if fused:
        # Read q/k/v as column-blocks 0/1/2 of the fused buffer: pure DMA strides, no copies.
        q_in, k_in, v_in = qkv, qkv, qkv
        q_map = lambda b, qi, ki: (b * qpb + qi, 0)
        k_map = lambda b, qi, ki: (b * kpb + ki, 1)
        v_map = lambda b, qi, ki: (b * kpb + ki, 2)
    else:
        # TODO(synk): H not a multiple of 128 -> fall back to wrapper-side column slices
        # (full-H blocks still satisfy the lane rule since H is then the full array dim).
        q_in, k_in, v_in = qkv[:, :H], qkv[:, H:2 * H], qkv[:, 2 * H:]
        q_map = lambda b, qi, ki: (b * qpb + qi, 0)
        k_map = lambda b, qi, ki: (b * kpb + ki, 0)
        v_map = lambda b, qi, ki: (b * kpb + ki, 0)

    in_specs = [
        pl.BlockSpec((tq, H), q_map),
        pl.BlockSpec((tkv, H), k_map),
        pl.BlockSpec((tkv, H), v_map),
    ]
    inputs = [q_in, k_in, v_in]
    if has_bias:
        in_specs.append(pl.BlockSpec((num_heads, tq, tkv), lambda b, qi, ki: (b, qi, ki)))
        inputs.append(attn_bias)

    kernel = functools.partial(_flash_attn_kernel, num_heads=num_heads, scaling=scaling,
                               has_bias=has_bias, kv_steps=kpb)
    return pl.pallas_call(
        kernel,
        out_shape=jax.ShapeDtypeStruct((B * S, H), qkv.dtype),
        grid_spec=pltpu.PrefetchScalarGridSpec(
            num_scalar_prefetch=0,
            grid=(B, qpb, kpb),
            in_specs=in_specs,
            out_specs=pl.BlockSpec((tq, H), lambda b, qi, ki: (b * qpb + qi, 0)),
            scratch_shapes=[
                pltpu.VMEM((num_heads, tq, 1), jnp.float32),   # running max
                pltpu.VMEM((num_heads, tq, 1), jnp.float32),   # running sum
                pltpu.VMEM((num_heads, tq, D), jnp.float32),   # unnormalized output
            ]),
        compiler_params=pltpu.CompilerParams(
            dimension_semantics=("parallel", "parallel", "arbitrary"),
            vmem_limit_bytes=_VMEM_LIMIT),
    )(*inputs)


# ---------------------------------------------------------------------------
# Full encoder layer
# ---------------------------------------------------------------------------
def transformer_encoder_layer(x, params, *, num_heads, eps=1e-5,
                              attn_bias=None, post_ln=False):
    """x: (B, S, H). Weights stored as (in, out) == PyTorch nn.Linear weight.T."""
    # TODO(synk): dropout (attention / activation / output) omitted -- inference-mode forward.
    # TODO(synk): key_padding_mask masked_fill and return_attn paths not implemented.
    B, S, H = x.shape
    assert H % num_heads == 0, "embed_dim must be divisible by num_heads"
    D = H // num_heads
    scaling = float(D) ** -0.5
    x2 = x.reshape(B * S, H)
    bias = None
    if attn_bias is not None:
        bias = attn_bias.reshape(B * num_heads, S, S)

    def attn_block(inp2, residual2, ln_params):
        qkv = linear(inp2, params["w_qkv"], params["b_qkv"], ln=ln_params)    # (B*S, 3H)
        ctx = attention(qkv, B=B, S=S, H=H, num_heads=num_heads,
                        scaling=scaling, attn_bias=bias)                       # (B*S, H)
        return linear(ctx, params["w_o"], params["b_o"], residual=residual2)

    def ffn_block(inp2, residual2, ln_params):
        f = linear(inp2, params["w_fc1"], params["b_fc1"], activation="gelu", ln=ln_params)
        return linear(f, params["w_fc2"], params["b_fc2"], residual=residual2)

    ln1 = (params["ln1_w"], params["ln1_b"], eps)
    ln2 = (params["ln2_w"], params["ln2_b"], eps)
    if not post_ln:   # pre-LN (module default): LNs fused into QKV / fc1 prologues
        h = attn_block(x2, x2, ln1)
        out = ffn_block(h, h, ln2)
    else:             # post-LN: standalone LN after each residual
        h = layer_norm(attn_block(x2, x2, None), params["ln1_w"], params["ln1_b"], eps)
        out = layer_norm(ffn_block(h, h, None), params["ln2_w"], params["ln2_b"], eps)
    return out.reshape(B, S, H)


# ---------------------------------------------------------------------------
# Pure-JAX reference (mirrors the PyTorch forward in eval mode)
# ---------------------------------------------------------------------------
def _reference_forward(x, params, *, num_heads, eps=1e-5, attn_bias=None, post_ln=False):
    B, S, H = x.shape
    D = H // num_heads

    def ln(v, w, b):
        m = jnp.mean(v, axis=-1, keepdims=True)
        var = jnp.mean((v - m) ** 2, axis=-1, keepdims=True)
        return (v - m) * jax.lax.rsqrt(var + eps) * w + b

    def attn(h):
        qkv = h @ params["w_qkv"] + params["b_qkv"]
        q, k, v = jnp.split(qkv, 3, axis=-1)
        to_heads = lambda t: t.reshape(B, S, num_heads, D).transpose(0, 2, 1, 3)
        q = to_heads(q) * (float(D) ** -0.5)
        k, v = to_heads(k), to_heads(v)
        scores = jnp.einsum("bhqd,bhkd->bhqk", q, k)
        if attn_bias is not None:
            scores = scores + attn_bias
        probs = jax.nn.softmax(scores, axis=-1)
        ctx = jnp.einsum("bhqk,bhkd->bhqd", probs, v)
        ctx = ctx.transpose(0, 2, 1, 3).reshape(B, S, H)
        return ctx @ params["w_o"] + params["b_o"]

    def ffn(h):
        f = jax.nn.gelu(h @ params["w_fc1"] + params["b_fc1"], approximate=False)
        return f @ params["w_fc2"] + params["b_fc2"]

    if not post_ln:
        x1 = x + attn(ln(x, params["ln1_w"], params["ln1_b"]))
        out = x1 + ffn(ln(x1, params["ln2_w"], params["ln2_b"]))
    else:
        x1 = ln(x + attn(x), params["ln1_w"], params["ln1_b"])
        out = ln(x1 + ffn(x1), params["ln2_w"], params["ln2_b"])
    return out


if __name__ == "__main__":
    B, S, H, F_DIM, HEADS = 2, 16, 128, 256, 4   # small but lane-dense (H, F multiples of 128)
    key = jax.random.PRNGKey(0)
    ks = jax.random.split(key, 10)
    sc = 0.1
    params = {
        "ln1_w": jnp.ones((H,), jnp.float32),
        "ln1_b": jnp.zeros((H,), jnp.float32),
        "ln2_w": jnp.ones((H,), jnp.float32),
        "ln2_b": jnp.zeros((H,), jnp.float32),
        "w_qkv": jax.random.normal(ks[0], (H, 3 * H), jnp.float32) * sc,
        "b_qkv": jax.random.normal(ks[1], (3 * H,), jnp.float32) * sc,
        "w_o":   jax.random.normal(ks[2], (H, H), jnp.float32) * sc,
        "b_o":   jax.random.normal(ks[3], (H,), jnp.float32) * sc,
        "w_fc1": jax.random.normal(ks[4], (H, F_DIM), jnp.float32) * sc,
        "b_fc1": jax.random.normal(ks[5], (F_DIM,), jnp.float32) * sc,
        "w_fc2": jax.random.normal(ks[6], (F_DIM, H), jnp.float32) * sc,
        "b_fc2": jax.random.normal(ks[7], (H,), jnp.float32) * sc,
    }
    x = jax.random.normal(ks[8], (B, S, H), jnp.float32)
    bias = jax.random.normal(ks[9], (B, HEADS, S, S), jnp.float32) * 0.5

    def check(name, attn_bias, post_ln):
        y = transformer_encoder_layer(x, params, num_heads=HEADS,
                                      attn_bias=attn_bias, post_ln=post_ln)
        y = jax.block_until_ready(y)
        ref = _reference_forward(x, params, num_heads=HEADS,
                                 attn_bias=attn_bias, post_ln=post_ln)
        max_err = float(jnp.max(jnp.abs(y - ref)))
        assert jnp.allclose(y, ref, atol=2e-4, rtol=2e-4), \
            f"{name}: mismatch vs reference (max|diff|={max_err})"

    check("pre_ln", None, False)          # module default path (LN fused into matmuls)
    check("pre_ln_bias", bias, False)     # attn_bias path (tiled bias blocks)
    check("post_ln", None, True)          # post-LN path (standalone LN kernel)
    print("KERNEL_OK")
</pallas_src>

<mosaic_0001>
module attributes {stable_mosaic.version = 11 : i64} {
  func.func @kernel(%arg0: i32, %arg1: i32, %arg2: i32, %arg3: memref<32x128xf32, #tpu.memory_space<vmem>>, %arg4: memref<128x384xf32, #tpu.memory_space<vmem>>, %arg5: memref<1x384xf32, #tpu.memory_space<vmem>>, %arg6: memref<1x128xf32, #tpu.memory_space<vmem>>, %arg7: memref<1x128xf32, #tpu.memory_space<vmem>>, %arg8: memref<32x384xf32, #tpu.memory_space<vmem>>) attributes {dimension_semantics = [#tpu.dimension_semantics<parallel>, #tpu.dimension_semantics<parallel>, #tpu.dimension_semantics<arbitrary>], iteration_bounds = array<i64: 1, 1, 1>, scalar_prefetch = 0 : i64, scratch_operands = 0 : i64, tpu.core_type = #tpu.core_type<tc>, window_params = [{transform_indices = @transform_0, window_bounds = array<i64: 32, 128>}, {transform_indices = @transform_1, window_bounds = array<i64: 128, 384>}, {transform_indices = @transform_2, window_bounds = array<i64: 1, 384>}, {pipeline_mode = #tpu.pipeline_mode<synchronous>, transform_indices = @transform_3, window_bounds = array<i64: 1, 128>}, {pipeline_mode = #tpu.pipeline_mode<synchronous>, transform_indices = @transform_4, window_bounds = array<i64: 1, 128>}, {transform_indices = @transform_5, window_bounds = array<i64: 32, 384>}]} {
    %c0 = arith.constant 0 : index
    %c0_0 = arith.constant 0 : index
    %0 = vector.load %arg3[%c0, %c0_0] : memref<32x128xf32, #tpu.memory_space<vmem>>, vector<32x128xf32>
    %cst = arith.constant dense<0.000000e+00> : vector<32xf32>
    %1 = vector.multi_reduction <add>, %0, %cst [1] : vector<32x128xf32> to vector<32xf32>
    %2 = vector.shape_cast %1 : vector<32xf32> to vector<32x1xf32>
    %cst_1 = arith.constant 1.280000e+02 : f32
    %3 = vector.broadcast %cst_1 : f32 to vector<32x1xf32>
    %4 = arith.divf %2, %3 : vector<32x1xf32>
    %5 = vector.broadcast %4 : vector<32x1xf32> to vector<32x128xf32>
    %6 = arith.subf %0, %5 : vector<32x128xf32>
    %7 = arith.mulf %6, %6 : vector<32x128xf32>
    %cst_2 = arith.constant dense<0.000000e+00> : vector<32xf32>
    %8 = vector.multi_reduction <add>, %7, %cst_2 [1] : vector<32x128xf32> to vector<32xf32>
    %9 = vector.shape_cast %8 : vector<32xf32> to vector<32x1xf32>
    %cst_3 = arith.constant 1.280000e+02 : f32
    %10 = vector.broadcast %cst_3 : f32 to vector<32x1xf32>
    %11 = arith.divf %9, %10 : vector<32x1xf32>
    %cst_4 = arith.constant 9.99999974E-6 : f32
    %12 = vector.broadcast %cst_4 : f32 to vector<32x1xf32>
    %13 = arith.addf %11, %12 : vector<32x1xf32>
    %14 = math.rsqrt %13 : vector<32x1xf32>
    %15 = vector.broadcast %14 : vector<32x1xf32> to vector<32x128xf32>
    %16 = arith.mulf %6, %15 : vector<32x128xf32>
    %c0_5 = arith.constant 0 : index
    %c0_6 = arith.constant 0 : index
    %17 = vector.load %arg6[%c0_5, %c0_6] : memref<1x128xf32, #tpu.memory_space<vmem>>, vector<1x128xf32>
    %18 = vector.broadcast %17 : vector<1x128xf32> to vector<32x128xf32>
    %19 = arith.mulf %16, %18 : vector<32x128xf32>
    %c0_7 = arith.constant 0 : index
    %c0_8 = arith.constant 0 : index
    %20 = vector.load %arg7[%c0_7, %c0_8] : memref<1x128xf32, #tpu.memory_space<vmem>>, vector<1x128xf32>
    %21 = vector.broadcast %20 : vector<1x128xf32> to vector<32x128xf32>
    %22 = arith.addf %19, %21 : vector<32x128xf32>
    %c0_9 = arith.constant 0 : index
    %c0_10 = arith.constant 0 : index
    %23 = vector.load %arg4[%c0_9, %c0_10] : memref<128x384xf32, #tpu.memory_space<vmem>>, vector<128x384xf32>
    %cst_11 = arith.constant dense<0.000000e+00> : vector<32x384xf32>
    %24 = tpu.matmul %22, %23, %cst_11 {dimension_numbers = #tpu.dot_dimension_numbers<[1], [0], [0], [1], [0, 0, 1, 1], [], []>} : vector<32x128xf32>, vector<128x384xf32>, vector<32x384xf32> -> vector<32x384xf32>
    %c0_12 = arith.constant 0 : index
    %c0_13 = arith.constant 0 : index
    %25 = vector.load %arg5[%c0_12, %c0_13] : memref<1x384xf32, #tpu.memory_space<vmem>>, vector<1x384xf32>
    %26 = vector.broadcast %25 : vector<1x384xf32> to vector<32x384xf32>
    %27 = arith.addf %24, %26 : vector<32x384xf32>
    %c0_14 = arith.constant 0 : index
    %c0_15 = arith.constant 0 : index
    %28 = vector.load %arg8[%c0_14, %c0_15] : memref<32x384xf32, #tpu.memory_space<vmem>>, vector<32x384xf32>
    tpu.vector_store %arg8[%c0_14, %c0_15], %27 {strides = array<i32>} : memref<32x384xf32, #tpu.memory_space<vmem>>, vector<32x384xf32>,
    return
  }
  func.func @transform_0(%arg0: i32, %arg1: i32, %arg2: i32) -> (i32, i32) {
    %c0_i32 = arith.constant 0 : i32
    return %arg0, %arg2 : i32, i32
  }
  func.func @transform_1(%arg0: i32, %arg1: i32, %arg2: i32) -> (i32, i32) {
    %c0_i32 = arith.constant 0 : i32
    return %arg2, %arg1 : i32, i32
  }
  func.func @transform_2(%arg0: i32, %arg1: i32, %arg2: i32) -> (i32, i32) {
    %c0_i32 = arith.constant 0 : i32
    %c0_i32_0 = arith.constant 0 : i32
    return %c0_i32, %arg1 : i32, i32
  }
  func.func @transform_3(%arg0: i32, %arg1: i32, %arg2: i32) -> (i32, i32) {
    %c0_i32 = arith.constant 0 : i32
    %c0_i32_0 = arith.constant 0 : i32
    %c0_i32_1 = arith.constant 0 : i32
    return %c0_i32, %c0_i32_0 : i32, i32
  }
  func.func @transform_4(%arg0: i32, %arg1: i32, %arg2: i32) -> (i32, i32) {
    %c0_i32 = arith.constant 0 : i32
    %c0_i32_0 = arith.constant 0 : i32
    %c0_i32_1 = arith.constant 0 : i32
    return %c0_i32, %c0_i32_0 : i32, i32
  }
  func.func @transform_5(%arg0: i32, %arg1: i32, %arg2: i32) -> (i32, i32) {
    %c0_i32 = arith.constant 0 : i32
    return %arg0, %arg1 : i32, i32
  }
}

</mosaic_0001>

<llo_original>
// kernel: tpu_custom_call.1
$region0: #{tpu_custom_call.1}
  #allocation0 [shape = 'u32[]', space=smem, size = 0x4, offset = 0x4, fixed_abs, tag = 'smem constant byte address 0x4 - core index']
  #allocation1 [shape = 'u32[144,128]{1,0:T(1,128)}', space=vmem, size = 0x12000, scoped, tag = 'internal scratch']
  %s0 = inlined_call_operand.hbm [shape: f32[32,128], index: 0, kind: input, shape index: {}]
  %s1 = inlined_call_operand.hbm [shape: f32[128,384], index: 1, kind: input, shape index: {}]
  %s2 = inlined_call_operand.vmem [shape: f32[1,384], index: 2, kind: input, shape index: {}]
  %s3 = inlined_call_operand.vmem [shape: f32[1,128], index: 3, kind: input, shape index: {}]
  %s4 = inlined_call_operand.vmem [shape: f32[1,128], index: 4, kind: input, shape index: {}]
  %s5 = inlined_call_operand.hbm [shape: f32[32,384], index: 5, kind: output, shape index: {}]
  %s6 = sld [smem:[#allocation0]]
  $region38: #{tpu_custom_call.1} parent=0
    _
  %s8 = ssub.s32 1, %s6
  %s9 = scalar_select 0, %s8, %s6
  $region1: #{tpu_custom_call.1} parent=0
    #allocation2 [shape = 'u8[16384]{0}', space=vmem, size = 0x4000, scoped, tag = 'input window, operand 0, single buffered']
    #allocation3 [shape = 's32[1]{0}', space=sflag, size = 0x4, scoped, tag = 'scoped memory for tpu_custom_call.1']
    #allocation4 [shape = 's32[1]{0}', space=sflag, size = 0x4, scoped, tag = 'scoped memory for tpu_custom_call.1']
    #allocation5 [shape = 'u8[196608]{0}', space=vmem, size = 0x30000, scoped, tag = 'input window, operand 1, single buffered']
    #allocation6 [shape = 's32[1]{0}', space=sflag, size = 0x4, scoped, tag = 'scoped memory for tpu_custom_call.1']
    #allocation7 [shape = 'u8[49152]{0}', space=vmem, size = 0xc000, scoped, tag = 'output window, operand 0, single buffered']
    %10 = vsyncpa [#allocation3], 0
    %11 = vsyncpa [#allocation6], 0
    %12 = vsyncpa [#allocation4], 0
    // Predicated region
    $region2: #{tpu_custom_call.1} parent=1 // pred_check
      _
    $region3: #{tpu_custom_call.1} parent=1 // pred_check_branch
      %14 = sbr.rel (0) target = $region5
    $region4: #{tpu_custom_call.1} parent=1 // pred_region
      %s16 = ssub.s32 512, 512
      %17 = vsyncadd [#allocation3], %s16
      %s18 = sshll.u32 [#allocation2], 4
      %s19 = int_to_ptr.vmem [resolvable:$true] %s18
      %24 = dma.hbm_to_vmem [thread:$0]  %s0, 512, %s19, [#allocation3], 128, 128, 8
    $region5: #{tpu_custom_call.1} parent=1 // pred_fallthru
      _
    // Predicated region
    $region6: #{tpu_custom_call.1} parent=1 // pred_check
      _
    $region7: #{tpu_custom_call.1} parent=1 // pred_check_branch
      %26 = sbr.rel (0) target = $region9
    $region8: #{tpu_custom_call.1} parent=1 // pred_region
      %s28 = ssub.s32 6144, 6144
      %29 = vsyncadd [#allocation6], %s28
      %s30 = sshll.u32 [#allocation5], 4
      %s31 = int_to_ptr.vmem [resolvable:$true] %s30
      %36 = dma.hbm_to_vmem [thread:$0]  %s1, 6144, %s31, [#allocation6], 384, 384, 24
    $region9: #{tpu_custom_call.1} parent=1 // pred_fallthru
      _
    // Predicated region
    $region10: #{tpu_custom_call.1} parent=1 // pred_check
      _
    $region11: #{tpu_custom_call.1} parent=1 // pred_check_branch
      %38 = sbr.rel (0) target = $region13
    $region12: #{tpu_custom_call.1} parent=1 // pred_region
      _
    $region13: #{tpu_custom_call.1} parent=1 // pred_fallthru
      _
    // Predicated region
    $region14: #{tpu_custom_call.1} parent=1 // pred_check
      _
    $region15: #{tpu_custom_call.1} parent=1 // pred_check_branch
      %40 = sbr.rel (0) target = $region17
    $region16: #{tpu_custom_call.1} parent=1 // pred_region
      _
    $region17: #{tpu_custom_call.1} parent=1 // pred_fallthru
      _
    // Predicated region
    $region18: #{tpu_custom_call.1} parent=1 // pred_check
      _
    $region19: #{tpu_custom_call.1} parent=1 // pred_check_branch
      %42 = sbr.rel (0) target = $region21
    $region20: #{tpu_custom_call.1} parent=1 // pred_region
      _
    $region21: #{tpu_custom_call.1} parent=1 // pred_fallthru
      _
    // Predicated region
    $region22: #{tpu_custom_call.1} parent=1 // pred_check
      _
    $region23: #{tpu_custom_call.1} parent=1 // pred_check_branch
      %44 = sbr.rel (0) target = $region25
    $region24: #{tpu_custom_call.1} parent=1 // pred_region
      %45 = dma.done [#allocation3], 512
    $region25: #{tpu_custom_call.1} parent=1 // pred_fallthru
      _
    // Predicated region
    $region26: #{tpu_custom_call.1} parent=1 // pred_check
      _
    $region27: #{tpu_custom_call.1} parent=1 // pred_check_branch
      %47 = sbr.rel (0) target = $region29
    $region28: #{tpu_custom_call.1} parent=1 // pred_region
      %48 = dma.done [#allocation6], 6144
    $region29: #{tpu_custom_call.1} parent=1 // pred_fallthru
      _
    %v49 = vld [vmem:[#allocation2] sm:$0xff]
    %v50 = vld [vmem:[#allocation2 + $0x8] sm:$0xff]
    %v51 = vld [vmem:[#allocation2 + $0x10] sm:$0xff]
    %v52 = vld [vmem:[#allocation2 + $0x18] sm:$0xff]
    %53 = vadd.xlane.f32.xlu0 %v49
    %v54 = vpop.xlane.xlu0 %53
    %55 = vadd.xlane.f32.xlu0 %v50
    %v56 = vpop.xlane.xlu0 %55
    %57 = vadd.xlane.f32.xlu0 %v51
    %v58 = vpop.xlane.xlu0 %57
    %59 = vadd.xlane.f32.xlu0 %v52
    %v60 = vpop.xlane.xlu0 %59
    %v61 = vrcp.pop 128.0
    %v62 = vmul.f32 %v54, %v61
    %v63 = vmul.f32 %v56, %v61
    %v64 = vmul.f32 %v58, %v61
    %v65 = vmul.f32 %v60, %v61
    %v66 = vsub.f32 %v49, %v62
    %v67 = vsub.f32 %v50, %v63
    %v68 = vsub.f32 %v51, %v64
    %v69 = vsub.f32 %v52, %v65
    %v70 = vmul.f32 %v66, %v66
    %v71 = vmul.f32 %v67, %v67
    %v72 = vmul.f32 %v68, %v68
    %v73 = vmul.f32 %v69, %v69
    %74 = vadd.xlane.f32.xlu0 %v70
    %v75 = vpop.xlane.xlu0 %74
    %76 = vadd.xlane.f32.xlu0 %v71
    %v77 = vpop.xlane.xlu0 %76
    %78 = vadd.xlane.f32.xlu0 %v72
    %v79 = vpop.xlane.xlu0 %78
    %80 = vadd.xlane.f32.xlu0 %v73
    %v81 = vpop.xlane.xlu0 %80
    %v82 = vmul.f32 %v75, %v61
    %v83 = vmul.f32 %v77, %v61
    %v84 = vmul.f32 %v79, %v61
    %v85 = vmul.f32 %v81, %v61
    %v86 = vadd.f32 %v82, 1e-05
    %v87 = vadd.f32 %v83, 1e-05
    %v88 = vadd.f32 %v84, 1e-05
    %v89 = vadd.f32 %v85, 1e-05
    %v90 = vrsqrt.pop %v86
    %v91 = vrsqrt.pop %v87
    %v92 = vrsqrt.pop %v88
    %v93 = vrsqrt.pop %v89
    %v94 = vmul.f32 %v66, %v90
    %v95 = vmul.f32 %v67, %v91
    %v96 = vmul.f32 %v68, %v92
    %v97 = vmul.f32 %v69, %v93
    %v98 = vld [vmem:[%s3] sm:$0x1]
    %v100 = vlaneseq
    %v101 = vshrl.u32 %v100, 7
    %v102 = vsub.s32 0, %v101
    %v103 = vrot.slane %v98, %v102
    %v105 = vmul.f32 %v94, %v103
    %v106 = vmul.f32 %v95, %v103
    %v107 = vmul.f32 %v96, %v103
    %v108 = vmul.f32 %v97, %v103
    %v109 = vld [vmem:[%s4] sm:$0x1]
    %v111 = vlaneseq
    %v112 = vshrl.u32 %v111, 7
    %v113 = vsub.s32 0, %v112
    %v114 = vrot.slane %v109, %v113
    %v116 = vadd.f32 %v105, %v114
    %v117 = vadd.f32 %v106, %v114
    %v118 = vadd.f32 %v107, %v114
    %v119 = vadd.f32 %v108, %v114
    %v120 = vld [vmem:[#allocation5] sm:$0xff]
    %v121 = vld [vmem:[#allocation5 + $0x8] sm:$0xff]
    %v122 = vld [vmem:[#allocation5 + $0x10] sm:$0xff]
    %v123 = vld [vmem:[#allocation5 + $0x18] sm:$0xff]
    %v124 = vld [vmem:[#allocation5 + $0x20] sm:$0xff]
    %v125 = vld [vmem:[#allocation5 + $0x28] sm:$0xff]
    %v126 = vld [vmem:[#allocation5 + $0x30] sm:$0xff]
    %v127 = vld [vmem:[#allocation5 + $0x38] sm:$0xff]
    %v128 = vld [vmem:[#allocation5 + $0x40] sm:$0xff]
    %v129 = vld [vmem:[#allocation5 + $0x48] sm:$0xff]
    %v130 = vld [vmem:[#allocation5 + $0x50] sm:$0xff]
    %v131 = vld [vmem:[#allocation5 + $0x58] sm:$0xff]
    %v132 = vld [vmem:[#allocation5 + $0x60] sm:$0xff]
    %v133 = vld [vmem:[#allocation5 + $0x68] sm:$0xff]
    %v134 = vld [vmem:[#allocation5 + $0x70] sm:$0xff]
    %v135 = vld [vmem:[#allocation5 + $0x78] sm:$0xff]
    %v136 = vld [vmem:[#allocation5 + $0x80] sm:$0xff]
    %v137 = vld [vmem:[#allocation5 + $0x88] sm:$0xff]
    %v138 = vld [vmem:[#allocation5 + $0x90] sm:$0xff]
    %v139 = vld [vmem:[#allocation5 + $0x98] sm:$0xff]
    %v140 = vld [vmem:[#allocation5 + $0xa0] sm:$0xff]
    %v141 = vld [vmem:[#allocation5 + $0xa8] sm:$0xff]
    %v142 = vld [vmem:[#allocation5 + $0xb0] sm:$0xff]
    %v143 = vld [vmem:[#allocation5 + $0xb8] sm:$0xff]
    %v144 = vld [vmem:[#allocation5 + $0xc0] sm:$0xff]
    %v145 = vld [vmem:[#allocation5 + $0xc8] sm:$0xff]
    %v146 = vld [vmem:[#allocation5 + $0xd0] sm:$0xff]
    %v147 = vld [vmem:[#allocation5 + $0xd8] sm:$0xff]
    %v148 = vld [vmem:[#allocation5 + $0xe0] sm:$0xff]
    %v149 = vld [vmem:[#allocation5 + $0xe8] sm:$0xff]
    %v150 = vld [vmem:[#allocation5 + $0xf0] sm:$0xff]
    %v151 = vld [vmem:[#allocation5 + $0xf8] sm:$0xff]
    %v152 = vld [vmem:[#allocation5 + $0x100] sm:$0xff]
    %v153 = vld [vmem:[#allocation5 + $0x108] sm:$0xff]
    %v154 = vld [vmem:[#allocation5 + $0x110] sm:$0xff]
    %v155 = vld [vmem:[#allocation5 + $0x118] sm:$0xff]
    %v156 = vld [vmem:[#allocation5 + $0x120] sm:$0xff]
    %v157 = vld [vmem:[#allocation5 + $0x128] sm:$0xff]
    %v158 = vld [vmem:[#allocation5 + $0x130] sm:$0xff]
    %v159 = vld [vmem:[#allocation5 + $0x138] sm:$0xff]
    %v160 = vld [vmem:[#allocation5 + $0x140] sm:$0xff]
    %v161 = vld [vmem:[#allocation5 + $0x148] sm:$0xff]
    %v162 = vld [vmem:[#allocation5 + $0x150] sm:$0xff]
    %v163 = vld [vmem:[#allocation5 + $0x158] sm:$0xff]
    %v164 = vld [vmem:[#allocation5 + $0x160] sm:$0xff]
    %v165 = vld [vmem:[#allocation5 + $0x168] sm:$0xff]
    %v166 = vld [vmem:[#allocation5 + $0x170] sm:$0xff]
    %v167 = vld [vmem:[#allocation5 + $0x178] sm:$0xff]
    %v168 = vld [vmem:[%s2] sm:$0x7]
    %v170 = vlaneseq
    %v171 = vshrl.u32 %v170, 7
    %v172 = vsub.s32 0, %v171
    %v173 = vrot.slane %v168, %v172
    %v174 = vlaneseq
    %v175 = vshrl.u32 %v174, 7
    %v176 = vsub.s32 1, %v175
    %v177 = vrot.slane %v168, %v176
    %v178 = vlaneseq
    %v179 = vshrl.u32 %v178, 7
    %v180 = vsub.s32 2, %v179
    %v181 = vrot.slane %v168, %v180
    %185 = vmatprep.subr.mxu0 %v121
    %186 = vmatpush1.msra.mxu0 %v120
    %187 = vmatprep.subr.mxu0 %v124
    %188 = vmatpush1.msra.mxu0 %v123
    %189 = vmatprep.subr.mxu0 %v127
    %190 = vmatpush1.msra.mxu0 %v126
    %191 = vmatprep.subr.mxu0 %v130
    %192 = vmatpush1.msra.mxu0 %v129
    %193 = vmatprep.subr.mxu0 %v133
    %194 = vmatpush1.msra.mxu0 %v132
    %195 = vmatprep.subr.mxu0 %v136
    %196 = vmatpush1.msra.mxu0 %v135
    %197 = vmatprep.subr.mxu0 %v139
    %198 = vmatpush1.msra.mxu0 %v138
    %199 = vmatprep.subr.mxu0 %v142
    %200 = vmatpush1.msra.mxu0 %v141
    %201 = vmatprep.subr.mxu0 %v145
    %202 = vmatpush1.msra.mxu0 %v144
    %203 = vmatprep.subr.mxu0 %v148
    %204 = vmatpush1.msra.mxu0 %v147
    %205 = vmatprep.subr.mxu0 %v151
    %206 = vmatpush1.msra.mxu0 %v150
    %207 = vmatprep.subr.mxu0 %v154
    %208 = vmatpush1.msra.mxu0 %v153
    %209 = vmatprep.subr.mxu0 %v157
    %210 = vmatpush1.msra.mxu0 %v156
    %211 = vmatprep.subr.mxu0 %v160
    %212 = vmatpush1.msra.mxu0 %v159
    %213 = vmatprep.subr.mxu0 %v163
    %214 = vmatpush1.msra.mxu0 %v162
    %215 = vmatprep.subr.mxu0 %v166
    %216 = vmatpush1.msra.mxu0 %v165
    %217 = vmatprep.subr.mxu0 0.0
    %218 = vmatpush1.msra.mxu0 0.0
    %219 = vmatprep.subr.mxu0 0.0
    %220 = vmatpush1.msra.mxu0 0.0
    %221 = vmatprep.subr.mxu0 0.0
    %222 = vmatpush1.msra.mxu0 0.0
    %223 = vmatprep.subr.mxu0 0.0
    %224 = vmatpush1.msra.mxu0 0.0
    %225 = vmatprep.subr.mxu0 0.0
    %226 = vmatpush1.msra.mxu0 0.0
    %227 = vmatprep.subr.mxu0 0.0
    %228 = vmatpush1.msra.mxu0 0.0
    %229 = vmatprep.subr.mxu0 0.0
    %230 = vmatpush1.msra.mxu0 0.0
    %231 = vmatprep.subr.mxu0 0.0
    %232 = vmatpush1.msra.mxu0 0.0
    %233 = vmatprep.subr.mxu0 0.0
    %234 = vmatpush1.msra.mxu0 0.0
    %235 = vmatprep.subr.mxu0 0.0
    %236 = vmatpush1.msra.mxu0 0.0
    %237 = vmatprep.subr.mxu0 0.0
    %238 = vmatpush1.msra.mxu0 0.0
    %239 = vmatprep.subr.mxu0 0.0
    %240 = vmatpush1.msra.mxu0 0.0
    %241 = vmatprep.subr.mxu0 0.0
    %242 = vmatpush1.msra.mxu0 0.0
    %243 = vmatprep.subr.mxu0 0.0
    %244 = vmatpush1.msra.mxu0 0.0
    %245 = vmatprep.subr.mxu0 0.0
    %246 = vmatpush1.msra.mxu0 0.0
    %247 = vmatprep.subr.mxu0 0.0
    %248 = vmatpush1.msra.mxu0 0.0
    %249 = vmatprep.mubr.f32.mxu0 0.0
    %250 = vmatmul.mubr.f32.gmra.mrb[0].mxu0 %v116
    %v251 = vpop.f32.mrb[0].mxu0
    %v252 = vadd.f32 %v173, %v251
    %v253 = vpop.f32.mrb[0].mxu0
    %v254 = vadd.f32 %v177, %v253
    %255 = vmatprep.mubr.f32.mxu0 0.0
    %256 = vmatmul.mubr.f32.gmra.mrb[0].mxu0 %v117
    %v257 = vpop.f32.mrb[0].mxu0
    %v258 = vadd.f32 %v173, %v257
    %v259 = vpop.f32.mrb[0].mxu0
    %v260 = vadd.f32 %v177, %v259
    %261 = vmatprep.mubr.f32.mxu0 0.0
    %262 = vmatmul.mubr.f32.gmra.mrb[0].mxu0 %v118
    %v263 = vpop.f32.mrb[0].mxu0
    %v264 = vadd.f32 %v173, %v263
    %v265 = vpop.f32.mrb[0].mxu0
    %v266 = vadd.f32 %v177, %v265
    %267 = vmatprep.mubr.f32.mxu0 0.0
    %268 = vmatmul.mubr.f32.gmra.mrb[0].mxu0 %v119
    %v269 = vpop.f32.mrb[0].mxu0
    %v270 = vadd.f32 %v173, %v269
    %v271 = vpop.f32.mrb[0].mxu0
    %v272 = vadd.f32 %v177, %v271
    %273 = vdwg.mxu0
    %274 = vmatprep.subr.mxu0 0.0
    %275 = vmatpush1.msra.mxu0 %v122
    %276 = vmatprep.subr.mxu0 0.0
    %277 = vmatpush1.msra.mxu0 %v125
    %278 = vmatprep.subr.mxu0 0.0
    %279 = vmatpush1.msra.mxu0 %v128
    %280 = vmatprep.subr.mxu0 0.0
    %281 = vmatpush1.msra.mxu0 %v131
    %282 = vmatprep.subr.mxu0 0.0
    %283 = vmatpush1.msra.mxu0 %v134
    %284 = vmatprep.subr.mxu0 0.0
    %285 = vmatpush1.msra.mxu0 %v137
    %286 = vmatprep.subr.mxu0 0.0
    %287 = vmatpush1.msra.mxu0 %v140
    %288 = vmatprep.subr.mxu0 0.0
    %289 = vmatpush1.msra.mxu0 %v143
    %290 = vmatprep.subr.mxu0 0.0
    %291 = vmatpush1.msra.mxu0 %v146
    %292 = vmatprep.subr.mxu0 0.0
    %293 = vmatpush1.msra.mxu0 %v149
    %294 = vmatprep.subr.mxu0 0.0
    %295 = vmatpush1.msra.mxu0 %v152
    %296 = vmatprep.subr.mxu0 0.0
    %297 = vmatpush1.msra.mxu0 %v155
    %298 = vmatprep.subr.mxu0 0.0
    %299 = vmatpush1.msra.mxu0 %v158
    %300 = vmatprep.subr.mxu0 0.0
    %301 = vmatpush1.msra.mxu0 %v161
    %302 = vmatprep.subr.mxu0 0.0
    %303 = vmatpush1.msra.mxu0 %v164
    %304 = vmatprep.subr.mxu0 0.0
    %305 = vmatpush1.msra.mxu0 %v167
    %306 = vmatprep.subr.mxu0 0.0
    %307 = vmatpush1.msra.mxu0 0.0
    %308 = vmatprep.subr.mxu0 0.0
    %309 = vmatpush1.msra.mxu0 0.0
    %310 = vmatprep.subr.mxu0 0.0
    %311 = vmatpush1.msra.mxu0 0.0
    %312 = vmatprep.subr.mxu0 0.0
    %313 = vmatpush1.msra.mxu0 0.0
    %314 = vmatprep.subr.mxu0 0.0
    %315 = vmatpush1.msra.mxu0 0.0
    %316 = vmatprep.subr.mxu0 0.0
    %317 = vmatpush1.msra.mxu0 0.0
    %318 = vmatprep.subr.mxu0 0.0
    %319 = vmatpush1.msra.mxu0 0.0
    %320 = vmatprep.subr.mxu0 0.0
    %321 = vmatpush1.msra.mxu0 0.0
    %322 = vmatprep.subr.mxu0 0.0
    %323 = vmatpush1.msra.mxu0 0.0
    %324 = vmatprep.subr.mxu0 0.0
    %325 = vmatpush1.msra.mxu0 0.0
    %326 = vmatprep.subr.mxu0 0.0
    %327 = vmatpush1.msra.mxu0 0.0
    %328 = vmatprep.subr.mxu0 0.0
    %329 = vmatpush1.msra.mxu0 0.0
    %330 = vmatprep.subr.mxu0 0.0
    %331 = vmatpush1.msra.mxu0 0.0
    %332 = vmatprep.subr.mxu0 0.0
    %333 = vmatpush1.msra.mxu0 0.0
    %334 = vmatprep.subr.mxu0 0.0
    %335 = vmatpush1.msra.mxu0 0.0
    %336 = vmatprep.subr.mxu0 0.0
    %337 = vmatpush1.msra.mxu0 0.0
    %338 = vmatprep.mubr.f32.mxu0 0.0
    %339 = vmatmul.mubr.f32.gmra.mrb[0].mxu0 %v116
    %v340 = vpop.f32.mrb[0].mxu0
    %v341 = vadd.f32 %v181, %v340
    %v342 = vpop.f32.mrb[0].mxu0
    %343 = vmatprep.mubr.f32.mxu0 0.0
    %344 = vmatmul.mubr.f32.gmra.mrb[0].mxu0 %v117
    %v345 = vpop.f32.mrb[0].mxu0
    %v346 = vadd.f32 %v181, %v345
    %v347 = vpop.f32.mrb[0].mxu0
    %348 = vmatprep.mubr.f32.mxu0 0.0
    %349 = vmatmul.mubr.f32.gmra.mrb[0].mxu0 %v118
    %v350 = vpop.f32.mrb[0].mxu0
    %v351 = vadd.f32 %v181, %v350
    %v352 = vpop.f32.mrb[0].mxu0
    %353 = vmatprep.mubr.f32.mxu0 0.0
    %354 = vmatmul.mubr.f32.gmra.mrb[0].mxu0 %v119
    %v355 = vpop.f32.mrb[0].mxu0
    %v356 = vadd.f32 %v181, %v355
    %v357 = vpop.f32.mrb[0].mxu0
    %358 = vdwg.mxu0
    %359 = vst [vmem:[#allocation7] sm:$0xff] %v252
    %360 = vst [vmem:[#allocation7 + $0x8] sm:$0xff] %v254
    %361 = vst [vmem:[#allocation7 + $0x10] sm:$0xff] %v341
    %362 = vst [vmem:[#allocation7 + $0x18] sm:$0xff] %v258
    %363 = vst [vmem:[#allocation7 + $0x20] sm:$0xff] %v260
    %364 = vst [vmem:[#allocation7 + $0x28] sm:$0xff] %v346
    %365 = vst [vmem:[#allocation7 + $0x30] sm:$0xff] %v264
    %366 = vst [vmem:[#allocation7 + $0x38] sm:$0xff] %v266
    %367 = vst [vmem:[#allocation7 + $0x40] sm:$0xff] %v351
    %368 = vst [vmem:[#allocation7 + $0x48] sm:$0xff] %v270
    %369 = vst [vmem:[#allocation7 + $0x50] sm:$0xff] %v272
    %370 = vst [vmem:[#allocation7 + $0x58] sm:$0xff] %v356
    // Predicated region
    $region30: #{tpu_custom_call.1} parent=1 // pred_check
      _
    $region31: #{tpu_custom_call.1} parent=1 // pred_check_branch
      %372 = sbr.rel (0) target = $region33
    $region32: #{tpu_custom_call.1} parent=1 // pred_region
      %s374 = ssub.s32 1536, 1536
      %375 = vsyncadd [#allocation4], %s374
      %s376 = sshll.u32 [#allocation7], 4
      %s377 = int_to_ptr.vmem [resolvable:$true] %s376
      %382 = dma.vmem_to_hbm [thread:$0]  %s377, 1536, %s5, [#allocation4], 384, 384, 24
    $region33: #{tpu_custom_call.1} parent=1 // pred_fallthru
      _
    // Predicated region
    $region34: #{tpu_custom_call.1} parent=1 // pred_check
      _
    $region35: #{tpu_custom_call.1} parent=1 // pred_check_branch
      %384 = sbr.rel (0) target = $region37
    $region36: #{tpu_custom_call.1} parent=1 // pred_region
      %385 = dma.done [#allocation4], 1536
    $region37: #{tpu_custom_call.1} parent=1 // pred_fallthru
      _
    %386 = vsyncpa [#allocation3], 1
    %387 = vsyncpa [#allocation6], 1
    %388 = vsyncpa [#allocation4], 1

</llo_original>
